<compile_context>
chip_gen: v5e
topology: v5e:2x2
jax: 0.10.0
libtpu: 0.0.40
codegen_flags: <defaults>
</compile_context>

<pallas_src>
import jax
import jax.numpy as jnp
from jax.experimental import pallas as pl
from jax.experimental.pallas import tpu as pltpu

_LANE = 128
_NEG_BIG = -1e30  # padded-class bias -> exp() == 0 after max subtraction


def _round_up(n, m):
    return ((n + m - 1) // m) * m


def _cdiv(a, b):
    return -(-a // b)


def _classifier_kernel(x_ref, w1_ref, b1_ref, w2_ref, b2_ref, w3_ref, b3_ref,
                       out_ref):
    # Cast activations to bf16 in-kernel (hidden under the matmul); f32 MXU acc.
    x = x_ref[...].astype(jnp.bfloat16)

    # fc_1 + ReLU
    h1 = jnp.dot(x, w1_ref[...], preferred_element_type=jnp.float32)
    h1 = jnp.maximum(h1 + b1_ref[...], 0.0)

    # fc_2 + ReLU
    h2 = jnp.dot(h1.astype(jnp.bfloat16), w2_ref[...],
                 preferred_element_type=jnp.float32)
    h2 = jnp.maximum(h2 + b2_ref[...], 0.0)

    # fc_3 ; padded classes carry a -1e30 bias so they vanish in the softmax.
    logits = jnp.dot(h2.astype(jnp.bfloat16), w3_ref[...],
                     preferred_element_type=jnp.float32)
    logits = logits + b3_ref[...]

    # Numerically stable softmax over the lane-dense (padded) class axis.
    m = jnp.max(logits, axis=-1, keepdims=True)
    e = jnp.exp(logits - m)
    denom = jnp.sum(e, axis=-1, keepdims=True)
    out_ref[...] = (e * pl.reciprocal(denom, approx=True)).astype(out_ref.dtype)


def prepare_params(params):
    """One-time pad + bf16 cast of the weights/biases (hoisted out of the
    per-call path).  Numerically exact: padded hidden lanes stay 0 through
    ReLU, padded w2/w3 rows are zero, padded class logits get -1e30."""
    w1, b1 = params["w1"], params["b1"]
    w2, b2 = params["w2"], params["b2"]
    w3, b3 = params["w3"], params["b3"]

    in_features, hidden = w1.shape
    num_classes = w3.shape[1]
    hp = _round_up(hidden, _LANE)        # padded hidden width (lane-dense)
    cp = _round_up(num_classes, _LANE)   # padded class width  (lane-dense)

    w1p = jnp.zeros((in_features, hp), jnp.bfloat16).at[:, :hidden].set(
        w1.astype(jnp.bfloat16))
    b1p = jnp.zeros((1, hp), jnp.float32).at[:, :hidden].set(b1.reshape(1, -1))
    w2p = jnp.zeros((hp, hp), jnp.bfloat16).at[:hidden, :hidden].set(
        w2.astype(jnp.bfloat16))
    b2p = jnp.zeros((1, hp), jnp.float32).at[:, :hidden].set(b2.reshape(1, -1))
    w3p = jnp.zeros((hp, cp), jnp.bfloat16).at[:hidden, :num_classes].set(
        w3.astype(jnp.bfloat16))
    b3p = jnp.full((1, cp), _NEG_BIG, jnp.float32).at[:, :num_classes].set(
        b3.reshape(1, -1))

    return {"w1": w1p, "b1": b1p, "w2": w2p, "b2": b2p, "w3": w3p, "b3": b3p,
            "num_classes": num_classes}


def feature_classifier(x, prepped, *, max_block_batch=512, min_grid=2):
    """x: [batch, in_features] float32 (raw, unpadded).
    prepped: output of prepare_params().
    Returns class-padded probabilities of shape [batch, round_up(C, 128)];
    padded class columns are exactly 0 (consumer slices [:, :num_classes])."""
    w1p, b1p = prepped["w1"], prepped["b1"]
    w2p, b2p = prepped["w2"], prepped["b2"]
    w3p, b3p = prepped["w3"], prepped["b3"]

    batch, in_features = x.shape
    hp = w1p.shape[1]
    cp = w3p.shape[1]

    # Batch tile: >= min_grid steps (both v7x TCs busy), even step count,
    # capped at max_block_batch rows, multiple of 16 sublanes (f32 needs 8;
    # 16 keeps headroom).  Last block may be partial; Pallas masks its store.
    n_steps = max(min_grid, _cdiv(batch, max_block_batch))
    if n_steps % 2:
        n_steps += 1
    tb = _round_up(_cdiv(batch, n_steps), 16)
    grid = (_cdiv(batch, tb),)

    m_eff = grid[0] * tb
    flops = 2 * m_eff * (in_features * hp + hp * hp + hp * cp)
    bytes_accessed = (x.size * 4 + w1p.size * 2 + w2p.size * 2 + w3p.size * 2
                      + (b1p.size + b2p.size + b3p.size) * 4 + batch * cp * 4)
    cost = pl.CostEstimate(flops=flops, transcendentals=m_eff * cp,
                           bytes_accessed=bytes_accessed)

    def full_spec(arr):
        # Resident across the whole grid (constant block index -> no re-DMA;
        # compiler demotes the redundant pipeline buffer).
        return pl.BlockSpec(arr.shape, lambda i: (0, 0))

    out = pl.pallas_call(
        _classifier_kernel,
        out_shape=jax.ShapeDtypeStruct((batch, cp), jnp.float32),
        grid=grid,
        in_specs=[
            pl.BlockSpec((tb, in_features), lambda i: (i, 0)),   # x: batch-tiled
            full_spec(w1p), full_spec(b1p),
            full_spec(w2p), full_spec(b2p),
            full_spec(w3p), full_spec(b3p),
        ],
        out_specs=pl.BlockSpec((tb, cp), lambda i: (i, 0)),
        compiler_params=pltpu.CompilerParams(
            dimension_semantics=("parallel",)),
        cost_estimate=cost,
    )(x, w1p, b1p, w2p, b2p, w3p, b3p)

    return out


def init_params(key, in_features, num_classes):
    """Deterministic init mimicking nn.Linear default (U[-1/sqrt(fan_in), ...])."""
    hidden = in_features // 5
    keys = jax.random.split(key, 6)

    def lin(kw, kb, fan_in, fan_out):
        bound = 1.0 / jnp.sqrt(jnp.float32(fan_in))
        w = jax.random.uniform(kw, (fan_in, fan_out), jnp.float32, -bound, bound)
        b = jax.random.uniform(kb, (1, fan_out), jnp.float32, -bound, bound)
        return w, b

    w1, b1 = lin(keys[0], keys[1], in_features, hidden)
    w2, b2 = lin(keys[2], keys[3], hidden, hidden)
    w3, b3 = lin(keys[4], keys[5], hidden, num_classes)
    return {"w1": w1, "b1": b1, "w2": w2, "b2": b2, "w3": w3, "b3": b3}


def reference(x, p):
    """Pure-JAX reference mirroring the kernel's bf16-operand / f32-accum path."""
    xb = x.astype(jnp.bfloat16)
    h1 = jnp.maximum(
        jnp.dot(xb, p["w1"].astype(jnp.bfloat16),
                preferred_element_type=jnp.float32) + p["b1"], 0.0)
    h2 = jnp.maximum(
        jnp.dot(h1.astype(jnp.bfloat16), p["w2"].astype(jnp.bfloat16),
                preferred_element_type=jnp.float32) + p["b2"], 0.0)
    logits = jnp.dot(h2.astype(jnp.bfloat16), p["w3"].astype(jnp.bfloat16),
                     preferred_element_type=jnp.float32) + p["b3"]
    return jax.nn.softmax(logits, axis=-1)


if __name__ == "__main__":
    key = jax.random.PRNGKey(0)
    k_x, k_p = jax.random.split(key)

    batch = 200                # deliberately not a multiple of the batch tile
    in_features = 160          # hidden = in_features // 5 = 32
    num_classes = 10

    x = jax.random.normal(k_x, (batch, in_features), jnp.float32)
    params = init_params(k_p, in_features, num_classes)

    # One-time (init-path) weight padding / bf16 cast.
    prepped = jax.block_until_ready(
        jax.tree_util.tree_map(lambda a: a, prepare_params(params)))

    out_padded = jax.block_until_ready(feature_classifier(x, prepped))

    # Consumer-side slice of the padded class axis (padded columns are exactly 0).
    out = out_padded[:, :num_classes]

    ref = reference(x, params)
    assert out_padded.shape == (batch, _round_up(num_classes, _LANE))
    assert out.shape == (batch, num_classes)
    assert jnp.allclose(out, ref, atol=5e-3, rtol=5e-2), \
        float(jnp.max(jnp.abs(out - ref)))
    assert jnp.allclose(jnp.sum(out, axis=-1), 1.0, atol=1e-2)
    # Padded class columns must be exactly zero probability.
    assert float(jnp.max(jnp.abs(out_padded[:, num_classes:]))) == 0.0

    print("KERNEL_OK")
</pallas_src>

<mosaic_0001>
module attributes {stable_mosaic.version = 11 : i64} {
  func.func @_classifier_kernel(%arg0: i32, %arg1: memref<112x160xf32, #tpu.memory_space<vmem>>, %arg2: memref<160x128xbf16, #tpu.memory_space<vmem>>, %arg3: memref<1x128xf32, #tpu.memory_space<vmem>>, %arg4: memref<128x128xbf16, #tpu.memory_space<vmem>>, %arg5: memref<1x128xf32, #tpu.memory_space<vmem>>, %arg6: memref<128x128xbf16, #tpu.memory_space<vmem>>, %arg7: memref<1x128xf32, #tpu.memory_space<vmem>>, %arg8: memref<112x128xf32, #tpu.memory_space<vmem>>) attributes {dimension_semantics = [#tpu.dimension_semantics<parallel>], iteration_bounds = array<i64: 2>, scalar_prefetch = 0 : i64, scratch_operands = 0 : i64, tpu.core_type = #tpu.core_type<tc>, window_params = [{transform_indices = @transform_0, window_bounds = array<i64: 112, 160>}, {pipeline_mode = #tpu.pipeline_mode<synchronous>, transform_indices = @transform_1, window_bounds = array<i64: 160, 128>}, {pipeline_mode = #tpu.pipeline_mode<synchronous>, transform_indices = @transform_2, window_bounds = array<i64: 1, 128>}, {pipeline_mode = #tpu.pipeline_mode<synchronous>, transform_indices = @transform_3, window_bounds = array<i64: 128, 128>}, {pipeline_mode = #tpu.pipeline_mode<synchronous>, transform_indices = @transform_4, window_bounds = array<i64: 1, 128>}, {pipeline_mode = #tpu.pipeline_mode<synchronous>, transform_indices = @transform_5, window_bounds = array<i64: 128, 128>}, {pipeline_mode = #tpu.pipeline_mode<synchronous>, transform_indices = @transform_6, window_bounds = array<i64: 1, 128>}, {transform_indices = @transform_7, window_bounds = array<i64: 112, 128>}]} {
    %c0 = arith.constant 0 : index
    %c0_0 = arith.constant 0 : index
    %0 = vector.load %arg1[%c0, %c0_0] : memref<112x160xf32, #tpu.memory_space<vmem>>, vector<112x160xf32>
    %1 = arith.truncf %0 : vector<112x160xf32> to vector<112x160xbf16>
    %c0_1 = arith.constant 0 : index
    %c0_2 = arith.constant 0 : index
    %2 = vector.load %arg2[%c0_1, %c0_2] : memref<160x128xbf16, #tpu.memory_space<vmem>>, vector<160x128xbf16>
    %cst = arith.constant dense<0.000000e+00> : vector<112x128xf32>
    %3 = tpu.matmul %1, %2, %cst {dimension_numbers = #tpu.dot_dimension_numbers<[1], [0], [0], [1], [0, 0, 1, 1], [], []>} : vector<112x160xbf16>, vector<160x128xbf16>, vector<112x128xf32> -> vector<112x128xf32>
    %c0_3 = arith.constant 0 : index
    %c0_4 = arith.constant 0 : index
    %4 = vector.load %arg3[%c0_3, %c0_4] : memref<1x128xf32, #tpu.memory_space<vmem>>, vector<1x128xf32>
    %5 = vector.broadcast %4 : vector<1x128xf32> to vector<112x128xf32>
    %6 = arith.addf %3, %5 : vector<112x128xf32>
    %cst_5 = arith.constant 0.000000e+00 : f32
    %7 = vector.broadcast %cst_5 : f32 to vector<112x128xf32>
    %8 = arith.maximumf %6, %7 : vector<112x128xf32>
    %9 = arith.truncf %8 : vector<112x128xf32> to vector<112x128xbf16>
    %c0_6 = arith.constant 0 : index
    %c0_7 = arith.constant 0 : index
    %10 = vector.load %arg4[%c0_6, %c0_7] : memref<128x128xbf16, #tpu.memory_space<vmem>>, vector<128x128xbf16>
    %cst_8 = arith.constant dense<0.000000e+00> : vector<112x128xf32>
    %11 = tpu.matmul %9, %10, %cst_8 {dimension_numbers = #tpu.dot_dimension_numbers<[1], [0], [0], [1], [0, 0, 1, 1], [], []>} : vector<112x128xbf16>, vector<128x128xbf16>, vector<112x128xf32> -> vector<112x128xf32>
    %c0_9 = arith.constant 0 : index
    %c0_10 = arith.constant 0 : index
    %12 = vector.load %arg5[%c0_9, %c0_10] : memref<1x128xf32, #tpu.memory_space<vmem>>, vector<1x128xf32>
    %13 = vector.broadcast %12 : vector<1x128xf32> to vector<112x128xf32>
    %14 = arith.addf %11, %13 : vector<112x128xf32>
    %cst_11 = arith.constant 0.000000e+00 : f32
    %15 = vector.broadcast %cst_11 : f32 to vector<112x128xf32>
    %16 = arith.maximumf %14, %15 : vector<112x128xf32>
    %17 = arith.truncf %16 : vector<112x128xf32> to vector<112x128xbf16>
    %c0_12 = arith.constant 0 : index
    %c0_13 = arith.constant 0 : index
    %18 = vector.load %arg6[%c0_12, %c0_13] : memref<128x128xbf16, #tpu.memory_space<vmem>>, vector<128x128xbf16>
    %cst_14 = arith.constant dense<0.000000e+00> : vector<112x128xf32>
    %19 = tpu.matmul %17, %18, %cst_14 {dimension_numbers = #tpu.dot_dimension_numbers<[1], [0], [0], [1], [0, 0, 1, 1], [], []>} : vector<112x128xbf16>, vector<128x128xbf16>, vector<112x128xf32> -> vector<112x128xf32>
    %c0_15 = arith.constant 0 : index
    %c0_16 = arith.constant 0 : index
    %20 = vector.load %arg7[%c0_15, %c0_16] : memref<1x128xf32, #tpu.memory_space<vmem>>, vector<1x128xf32>
    %21 = vector.broadcast %20 : vector<1x128xf32> to vector<112x128xf32>
    %22 = arith.addf %19, %21 : vector<112x128xf32>
    %cst_17 = arith.constant dense<0xFF800000> : vector<112xf32>
    %23 = vector.multi_reduction <maximumf>, %22, %cst_17 [1] : vector<112x128xf32> to vector<112xf32>
    %24 = vector.shape_cast %23 : vector<112xf32> to vector<112x1xf32>
    %25 = vector.broadcast %24 : vector<112x1xf32> to vector<112x128xf32>
    %26 = arith.subf %22, %25 : vector<112x128xf32>
    %27 = math.exp %26 : vector<112x128xf32>
    %cst_18 = arith.constant dense<0.000000e+00> : vector<112xf32>
    %28 = vector.multi_reduction <add>, %27, %cst_18 [1] : vector<112x128xf32> to vector<112xf32>
    %29 = vector.shape_cast %28 : vector<112xf32> to vector<112x1xf32>
    %30 = tpu.reciprocal %29 {approx = true} : vector<112x1xf32> -> vector<112x1xf32>
    %31 = vector.broadcast %30 : vector<112x1xf32> to vector<112x128xf32>
    %32 = arith.mulf %27, %31 : vector<112x128xf32>
    %c0_19 = arith.constant 0 : index
    %c0_20 = arith.constant 0 : index
    %33 = vector.load %arg8[%c0_19, %c0_20] : memref<112x128xf32, #tpu.memory_space<vmem>>, vector<112x128xf32>
    tpu.vector_store %arg8[%c0_19, %c0_20], %32 {strides = array<i32>} : memref<112x128xf32, #tpu.memory_space<vmem>>, vector<112x128xf32>,
    return
  }
  func.func @transform_0(%arg0: i32) -> (i32, i32) {
    %c0_i32 = arith.constant 0 : i32
    %c0_i32_0 = arith.constant 0 : i32
    return %arg0, %c0_i32 : i32, i32
  }
  func.func @transform_1(%arg0: i32) -> (i32, i32) {
    %c0_i32 = arith.constant 0 : i32
    %c0_i32_0 = arith.constant 0 : i32
    %c0_i32_1 = arith.constant 0 : i32
    return %c0_i32, %c0_i32_0 : i32, i32
  }
  func.func @transform_2(%arg0: i32) -> (i32, i32) {
    %c0_i32 = arith.constant 0 : i32
    %c0_i32_0 = arith.constant 0 : i32
    %c0_i32_1 = arith.constant 0 : i32
    return %c0_i32, %c0_i32_0 : i32, i32
  }
  func.func @transform_3(%arg0: i32) -> (i32, i32) {
    %c0_i32 = arith.constant 0 : i32
    %c0_i32_0 = arith.constant 0 : i32
    %c0_i32_1 = arith.constant 0 : i32
    return %c0_i32, %c0_i32_0 : i32, i32
  }
  func.func @transform_4(%arg0: i32) -> (i32, i32) {
    %c0_i32 = arith.constant 0 : i32
    %c0_i32_0 = arith.constant 0 : i32
    %c0_i32_1 = arith.constant 0 : i32
    return %c0_i32, %c0_i32_0 : i32, i32
  }
  func.func @transform_5(%arg0: i32) -> (i32, i32) {
    %c0_i32 = arith.constant 0 : i32
    %c0_i32_0 = arith.constant 0 : i32
    %c0_i32_1 = arith.constant 0 : i32
    return %c0_i32, %c0_i32_0 : i32, i32
  }
  func.func @transform_6(%arg0: i32) -> (i32, i32) {
    %c0_i32 = arith.constant 0 : i32
    %c0_i32_0 = arith.constant 0 : i32
    %c0_i32_1 = arith.constant 0 : i32
    return %c0_i32, %c0_i32_0 : i32, i32
  }
  func.func @transform_7(%arg0: i32) -> (i32, i32) {
    %c0_i32 = arith.constant 0 : i32
    %c0_i32_0 = arith.constant 0 : i32
    return %arg0, %c0_i32 : i32, i32
  }
}

</mosaic_0001>

<llo_original>
// kernel: tpu_custom_call.1
$region0: #{tpu_custom_call.1}
  #allocation0 [shape = 'u32[]', space=smem, size = 0x4, offset = 0x4, fixed_abs, tag = 'smem constant byte address 0x4 - core index']
  #allocation1 [shape = 'u32[72,128]{1,0:T(1,128)}', space=vmem, size = 0x9000, scoped, tag = 'internal scratch']
  %s0 = inlined_call_operand.vmem [shape: f32[200,160], index: 0, kind: input, shape index: {}]
  %s1 = inlined_call_operand.vmem [shape: bf16[160,128], index: 1, kind: input, shape index: {}]
  %s2 = inlined_call_operand.vmem [shape: f32[1,128], index: 2, kind: input, shape index: {}]
  %s3 = inlined_call_operand.vmem [shape: bf16[128,128], index: 3, kind: input, shape index: {}]
  %s4 = inlined_call_operand.vmem [shape: f32[1,128], index: 4, kind: input, shape index: {}]
  %s5 = inlined_call_operand.vmem [shape: bf16[128,128], index: 5, kind: input, shape index: {}]
  %s6 = inlined_call_operand.vmem [shape: f32[1,128], index: 6, kind: input, shape index: {}]
  %s7 = inlined_call_operand.hbm [shape: f32[200,128], index: 7, kind: output, shape index: {}]
  %s8 = sld [smem:[#allocation0]]
  $region61: #{tpu_custom_call.1} parent=0
    _
  %s10 = ssub.s32 1, %s8
  %s11 = scalar_select 0, %s10, %s8
  $region1: #{tpu_custom_call.1} parent=0
    #allocation2 [shape = 'u8[114688]{0}', space=vmem, size = 0x1c000, scoped, tag = 'output window, operand 0']
    #allocation3 [shape = 's32[2]{0}', space=sflag, size = 0x8, scoped, tag = 'scoped memory for tpu_custom_call.1']
    %12 = vsyncpa [#allocation3], 0
    %s13 = scalar_lea.sflag [#allocation3], 1
    %14 = vsyncpa %s13, 0
    loop: start=0, step=1, limit=4
    $region2: #{tpu_custom_call.1} parent=1 // loop_pre_header
      _
    $region3: #{tpu_custom_call.1} parent=1 // loop_header
      %s16 = sphi 0, %s20
      %p17 = scmp.ge.s32.totalorder %s16, 4
      %s26 = sphi 0, %s28
      %s29 = sphi 0, %s26
      %s30 = sphi 0, %s29
      %s46 = sphi 0, %s30
      %s50 = sphi 0, %s50
      %s52 = sphi 0, %s50
      %s53 = sphi 0, %s52
      %s67 = sphi 0, %s53
      %s71 = sphi 0, %s71
      %s73 = sphi 0, %s71
      %s74 = sphi 0, %s73
      %s88 = sphi 0, %s74
      %s92 = sphi 0, %s92
      %s94 = sphi 0, %s92
      %s95 = sphi 0, %s94
      %s109 = sphi 0, %s95
      %s113 = sphi 0, %s113
      %s115 = sphi 0, %s113
      %s116 = sphi 0, %s115
      %s130 = sphi 0, %s116
      %s134 = sphi 0, %s134
      %s136 = sphi 0, %s134
      %s137 = sphi 0, %s136
      %s151 = sphi 0, %s137
      %s155 = sphi 0, %s155
      %s157 = sphi 0, %s155
      %s158 = sphi 0, %s157
      %s172 = sphi 0, %s158
      %s178 = sphi 0, %s180
      %s181 = sphi 0, %s178
      %s182 = sphi 0, %s181
      %s198 = sphi 0, %s182
    $region4: #{tpu_custom_call.1} parent=1 // loop_header_branch
      %19 = sbr.rel (%p17) target = $region8
    $region5: #{tpu_custom_call.1} parent=1 // loop_body
      %s21 = ssub.s32 %s16, 1
      %s22 = ssub.s32 %s16, 2
      %s23 = sadd.s32 %s16, 1
      %s24 = ssub.s32 %s16, %s23
      %p25 = scmp.eq.s32.totalorder %s24, 0
      %s27 = sadd.s32 %s26, 1
      %s28 = scalar_select %p25, %s26, %s27
      %p31 = pneg %p25
      %p32 = scmp.eq.s32.totalorder %s16, 1
      %p33 = por %p31, %p32
      %p34 = scmp.ne.s32.totalorder %s26, %s29
      %p35 = scmp.eq.s32.totalorder %s16, 0
      %p36 = por %p34, %p35
      %p37 = scmp.ne.s32.totalorder %s26, %s29
      %p38 = scmp.eq.s32.totalorder %s21, 1
      %p39 = por %p37, %p38
      %p40 = scmp.ne.s32.totalorder %s29, %s30
      %p41 = scmp.eq.s32.totalorder %s21, 0
      %p42 = por %p40, %p41
      %p43 = scmp.ne.s32.totalorder %s29, %s30
      %p44 = scmp.eq.s32.totalorder %s22, 1
      %p45 = por %p43, %p44
      %p47 = scmp.ne.s32.totalorder %s30, %s46
      %p48 = scmp.eq.s32.totalorder %s22, 0
      %p49 = por %p47, %p48
      %s51 = sadd.s32 %s50, 1
      %p54 = scmp.eq.s32.totalorder %s16, 1
      %p55 = scmp.ne.s32.totalorder %s50, %s52
      %p56 = scmp.eq.s32.totalorder %s16, 0
      %p57 = por %p55, %p56
      %p58 = scmp.ne.s32.totalorder %s50, %s52
      %p59 = scmp.eq.s32.totalorder %s21, 1
      %p60 = por %p58, %p59
      %p61 = scmp.ne.s32.totalorder %s52, %s53
      %p62 = scmp.eq.s32.totalorder %s21, 0
      %p63 = por %p61, %p62
      %p64 = scmp.ne.s32.totalorder %s52, %s53
      %p65 = scmp.eq.s32.totalorder %s22, 1
      %p66 = por %p64, %p65
      %p68 = scmp.ne.s32.totalorder %s53, %s67
      %p69 = scmp.eq.s32.totalorder %s22, 0
      %p70 = por %p68, %p69
      %s72 = sadd.s32 %s71, 1
      %p75 = scmp.eq.s32.totalorder %s16, 1
      %p76 = scmp.ne.s32.totalorder %s71, %s73
      %p77 = scmp.eq.s32.totalorder %s16, 0
      %p78 = por %p76, %p77
      %p79 = scmp.ne.s32.totalorder %s71, %s73
      %p80 = scmp.eq.s32.totalorder %s21, 1
      %p81 = por %p79, %p80
      %p82 = scmp.ne.s32.totalorder %s73, %s74
      %p83 = scmp.eq.s32.totalorder %s21, 0
      %p84 = por %p82, %p83
      %p85 = scmp.ne.s32.totalorder %s73, %s74
      %p86 = scmp.eq.s32.totalorder %s22, 1
      %p87 = por %p85, %p86
      %p89 = scmp.ne.s32.totalorder %s74, %s88
      %p90 = scmp.eq.s32.totalorder %s22, 0
      %p91 = por %p89, %p90
      %s93 = sadd.s32 %s92, 1
      %p96 = scmp.eq.s32.totalorder %s16, 1
      %p97 = scmp.ne.s32.totalorder %s92, %s94
      %p98 = scmp.eq.s32.totalorder %s16, 0
      %p99 = por %p97, %p98
      %p100 = scmp.ne.s32.totalorder %s92, %s94
      %p101 = scmp.eq.s32.totalorder %s21, 1
      %p102 = por %p100, %p101
      %p103 = scmp.ne.s32.totalorder %s94, %s95
      %p104 = scmp.eq.s32.totalorder %s21, 0
      %p105 = por %p103, %p104
      %p106 = scmp.ne.s32.totalorder %s94, %s95
      %p107 = scmp.eq.s32.totalorder %s22, 1
      %p108 = por %p106, %p107
      %p110 = scmp.ne.s32.totalorder %s95, %s109
      %p111 = scmp.eq.s32.totalorder %s22, 0
      %p112 = por %p110, %p111
      %s114 = sadd.s32 %s113, 1
      %p117 = scmp.eq.s32.totalorder %s16, 1
      %p118 = scmp.ne.s32.totalorder %s113, %s115
      %p119 = scmp.eq.s32.totalorder %s16, 0
      %p120 = por %p118, %p119
      %p121 = scmp.ne.s32.totalorder %s113, %s115
      %p122 = scmp.eq.s32.totalorder %s21, 1
      %p123 = por %p121, %p122
      %p124 = scmp.ne.s32.totalorder %s115, %s116
      %p125 = scmp.eq.s32.totalorder %s21, 0
      %p126 = por %p124, %p125
      %p127 = scmp.ne.s32.totalorder %s115, %s116
      %p128 = scmp.eq.s32.totalorder %s22, 1
      %p129 = por %p127, %p128
      %p131 = scmp.ne.s32.totalorder %s116, %s130
      %p132 = scmp.eq.s32.totalorder %s22, 0
      %p133 = por %p131, %p132
      %s135 = sadd.s32 %s134, 1
      %p138 = scmp.eq.s32.totalorder %s16, 1
      %p139 = scmp.ne.s32.totalorder %s134, %s136
      %p140 = scmp.eq.s32.totalorder %s16, 0
      %p141 = por %p139, %p140
      %p142 = scmp.ne.s32.totalorder %s134, %s136
      %p143 = scmp.eq.s32.totalorder %s21, 1
      %p144 = por %p142, %p143
      %p145 = scmp.ne.s32.totalorder %s136, %s137
      %p146 = scmp.eq.s32.totalorder %s21, 0
      %p147 = por %p145, %p146
      %p148 = scmp.ne.s32.totalorder %s136, %s137
      %p149 = scmp.eq.s32.totalorder %s22, 1
      %p150 = por %p148, %p149
      %p152 = scmp.ne.s32.totalorder %s137, %s151
      %p153 = scmp.eq.s32.totalorder %s22, 0
      %p154 = por %p152, %p153
      %s156 = sadd.s32 %s155, 1
      %p159 = scmp.eq.s32.totalorder %s16, 1
      %p160 = scmp.ne.s32.totalorder %s155, %s157
      %p161 = scmp.eq.s32.totalorder %s16, 0
      %p162 = por %p160, %p161
      %p163 = scmp.ne.s32.totalorder %s155, %s157
      %p164 = scmp.eq.s32.totalorder %s21, 1
      %p165 = por %p163, %p164
      %p166 = scmp.ne.s32.totalorder %s157, %s158
      %p167 = scmp.eq.s32.totalorder %s21, 0
      %p168 = por %p166, %p167
      %p169 = scmp.ne.s32.totalorder %s157, %s158
      %p170 = scmp.eq.s32.totalorder %s22, 1
      %p171 = por %p169, %p170
      %p173 = scmp.ne.s32.totalorder %s158, %s172
      %p174 = scmp.eq.s32.totalorder %s22, 0
      %p175 = por %p173, %p174
      %s176 = ssub.s32 %s16, %s23
      %p177 = scmp.eq.s32.totalorder %s176, 0
      %s179 = sadd.s32 %s178, 1
      %s180 = scalar_select %p177, %s178, %s179
      %p183 = pneg %p177
      %p184 = scmp.eq.s32.totalorder %s16, 1
      %p185 = por %p183, %p184
      %p186 = scmp.ne.s32.totalorder %s178, %s181
      %p187 = scmp.eq.s32.totalorder %s16, 0
      %p188 = por %p186, %p187
      %p189 = scmp.ne.s32.totalorder %s178, %s181
      %p190 = scmp.eq.s32.totalorder %s21, 1
      %p191 = por %p189, %p190
      %p192 = scmp.ne.s32.totalorder %s181, %s182
      %p193 = scmp.eq.s32.totalorder %s21, 0
      %p194 = por %p192, %p193
      %p195 = scmp.ne.s32.totalorder %s181, %s182
      %p196 = scmp.eq.s32.totalorder %s22, 1
      %p197 = por %p195, %p196
      %p199 = scmp.ne.s32.totalorder %s182, %s198
      %p200 = scmp.eq.s32.totalorder %s22, 0
      %p201 = por %p199, %p200
      %p202 = scmp.le.s32.totalorder 1, %s16
      %p203 = scmp.lt.s32.totalorder %s16, 3
      %p204 = pnand %p202, %p203
      %p205 = pneg %p204
      // Predicated region
      $region9: #{tpu_custom_call.1} parent=5 // pred_check
        _
      $region10: #{tpu_custom_call.1} parent=5 // pred_check_branch
        %207 = sbr.rel (%p204) target = $region12
      $region11: #{tpu_custom_call.1} parent=5 // pred_region
        %s208 = ssub.s32 %s16, 1
        // Predicated region
        $region13: #{tpu_custom_call.1} parent=11 // pred_check
          %p209 = pneg %p63
        $region14: #{tpu_custom_call.1} parent=11 // pred_check_branch
          %211 = sbr.rel (%p209) target = $region16
        $region15: #{tpu_custom_call.1} parent=11 // pred_region
          _
        $region16: #{tpu_custom_call.1} parent=11 // pred_fallthru
          _
        // Predicated region
        $region17: #{tpu_custom_call.1} parent=11 // pred_check
          %p212 = pneg %p84
        $region18: #{tpu_custom_call.1} parent=11 // pred_check_branch
          %214 = sbr.rel (%p212) target = $region20
        $region19: #{tpu_custom_call.1} parent=11 // pred_region
          _
        $region20: #{tpu_custom_call.1} parent=11 // pred_fallthru
          _
        // Predicated region
        $region21: #{tpu_custom_call.1} parent=11 // pred_check
          %p215 = pneg %p105
        $region22: #{tpu_custom_call.1} parent=11 // pred_check_branch
          %217 = sbr.rel (%p215) target = $region24
        $region23: #{tpu_custom_call.1} parent=11 // pred_region
          _
        $region24: #{tpu_custom_call.1} parent=11 // pred_fallthru
          _
        // Predicated region
        $region25: #{tpu_custom_call.1} parent=11 // pred_check
          %p218 = pneg %p126
        $region26: #{tpu_custom_call.1} parent=11 // pred_check_branch
          %220 = sbr.rel (%p218) target = $region28
        $region27: #{tpu_custom_call.1} parent=11 // pred_region
          _
        $region28: #{tpu_custom_call.1} parent=11 // pred_fallthru
          _
        // Predicated region
        $region29: #{tpu_custom_call.1} parent=11 // pred_check
          %p221 = pneg %p147
        $region30: #{tpu_custom_call.1} parent=11 // pred_check_branch
          %223 = sbr.rel (%p221) target = $region32
        $region31: #{tpu_custom_call.1} parent=11 // pred_region
          _
        $region32: #{tpu_custom_call.1} parent=11 // pred_fallthru
          _
        // Predicated region
        $region33: #{tpu_custom_call.1} parent=11 // pred_check
          %p224 = pneg %p168
        $region34: #{tpu_custom_call.1} parent=11 // pred_check_branch
          %226 = sbr.rel (%p224) target = $region36
        $region35: #{tpu_custom_call.1} parent=11 // pred_region
          _
        $region36: #{tpu_custom_call.1} parent=11 // pred_fallthru
          _
      $region12: #{tpu_custom_call.1} parent=5 // pred_fallthru
        _
      %p227 = scmp.lt.s32.totalorder %s16, 2
      // Predicated region
      $region37: #{tpu_custom_call.1} parent=5 // pred_check
        %p228 = pneg %p227
      $region38: #{tpu_custom_call.1} parent=5 // pred_check_branch
        %230 = sbr.rel (%p228) target = $region40
      $region39: #{tpu_custom_call.1} parent=5 // pred_region
        // Predicated region
        $region41: #{tpu_custom_call.1} parent=39 // pred_check
          %p231 = pneg %p36
        $region42: #{tpu_custom_call.1} parent=39 // pred_check_branch
          %233 = sbr.rel (%p231) target = $region44
        $region43: #{tpu_custom_call.1} parent=39 // pred_region
          %s234 = smul.u32 14, %s16
          %s235 = ssub.s32 25, %s234
          %p236 = scmp.lt.s32.totalorder %s235, 14
          %s237 = scalar_select %p236, %s235, 14
          %s238 = smul.u32 8, %s237
          %s239 = smul.u32 %s238, 2
          %p240 = scmp.lt.s32.totalorder %s234, 24
          %s241 = scalar_select %p240, %s234, 24
          %s242 = smul.addr %s241, 2
          %s243 = smul.addr %s242, 8
          %s244 = scalar_lea.vmem %s0, %s243
          %s245 = smul.u32 14, %s16
          %s246 = ssub.s32 25, %s245
          %p247 = scmp.lt.s32.totalorder %s246, 14
          %s248 = scalar_select %p247, %s246, 14
          %s249 = smul.u32 8, %s248
          %s250 = smul.u32 %s249, 2
        $region44: #{tpu_custom_call.1} parent=39 // pred_fallthru
          _
      $region40: #{tpu_custom_call.1} parent=5 // pred_fallthru
        _
      %p251 = scmp.le.s32.totalorder 1, %s16
      %p252 = scmp.lt.s32.totalorder %s16, 3
      %p253 = pnand %p251, %p252
      %p254 = pneg %p253
      // Predicated region
      $region45: #{tpu_custom_call.1} parent=5 // pred_check
        _
      $region46: #{tpu_custom_call.1} parent=5 // pred_check_branch
        %256 = sbr.rel (%p253) target = $region48
      $region47: #{tpu_custom_call.1} parent=5 // pred_region
        %s257 = ssub.s32 %s16, 1
        %s258 = smul.u32 14, %s21
        %s259 = ssub.s32 25, %s258
        %p260 = scmp.lt.s32.totalorder %s259, 14
        %s261 = scalar_select %p260, %s259, 14
        %s262 = smul.u32 8, %s261
        %s263 = smul.u32 %s262, 2
        %p264 = scmp.lt.s32.totalorder %s258, 24
        %s265 = scalar_select %p264, %s258, 24
        %s266 = smul.addr %s265, 2
        %s267 = smul.addr %s266, 8
        %s268 = scalar_lea.vmem %s0, %s267
        %p269 = pneg %p42
        %p270 = pneg %p39
        %p271 = pneg %p63
        %p272 = pneg %p60
        %p273 = pneg %p84
        %p274 = pneg %p81
        %p275 = pneg %p105
        %p276 = pneg %p102
        %p277 = pneg %p126
        %p278 = pneg %p123
        %p279 = pneg %p147
        %p280 = pneg %p144
        %p281 = pneg %p168
        %p282 = pneg %p165
        %p283 = pneg %p194
        %p284 = pneg %p191
        %s285 = sand.u32 %s181, 1
        %s286 = scalar_lea.sflag [#allocation3], %s285
        %s287 = sand.u32 %s181, 1
        %s288 = smul.addr %s287, 112
        %s289 = scalar_lea.vmem [#allocation2], %s288
        %s290 = smul.u32 14, %s21
        %s291 = ssub.s32 25, %s290
        %p292 = scmp.lt.s32.totalorder %s291, 14
        %s293 = scalar_select %p292, %s291, 14
        %s294 = smul.u32 8, %s293
        %s295 = smul.u32 %s294, 2
        %p296 = scmp.lt.s32.totalorder %s290, 24
        %s297 = scalar_select %p296, %s290, 24
        %s298 = smul.addr %s297, 2
        %s299 = smul.addr %s298, 8
        %s300 = scalar_lea.vmem %s0, %s299
        %s301 = smul.u32 14, %s21
        %s302 = ssub.s32 25, %s301
        %p303 = scmp.lt.s32.totalorder %s302, 14
        %s304 = scalar_select %p303, %s302, 14
        %s305 = smul.u32 8, %s304
        %s306 = smul.u32 %s305, 2
        %s307 = smul.u32 14, %s21
        %s308 = ssub.s32 25, %s307
        %p309 = scmp.lt.s32.totalorder %s308, 14
        %s310 = scalar_select %p309, %s308, 14
        %s311 = smul.u32 8, %s310
        %v313 = vld [vmem:[%s300] sm:$0xff]
        %v314 = vld [vmem:[%s300 + $0x8] sm:$0xff]
        %v315 = vld [vmem:[%s300 + $0x10] sm:$0xff]
        %v316 = vld [vmem:[%s300 + $0x18] sm:$0xff]
        %v317 = vld [vmem:[%s300 + $0x20] sm:$0xff]
        %v318 = vld [vmem:[%s300 + $0x28] sm:$0xff]
        %v319 = vld [vmem:[%s300 + $0x30] sm:$0xff]
        %v320 = vld [vmem:[%s300 + $0x38] sm:$0xff]
        %v321 = vld [vmem:[%s300 + $0x40] sm:$0xff]
        %v322 = vld [vmem:[%s300 + $0x48] sm:$0xff]
        %v323 = vld [vmem:[%s300 + $0x50] sm:$0xff]
        %v324 = vld [vmem:[%s300 + $0x58] sm:$0xff]
        %v325 = vld [vmem:[%s300 + $0x60] sm:$0xff]
        %v326 = vld [vmem:[%s300 + $0x68] sm:$0xff]
        %v327 = vld [vmem:[%s300 + $0x70] sm:$0xff]
        %v328 = vld [vmem:[%s300 + $0x78] sm:$0xff]
        %v329 = vld [vmem:[%s300 + $0x80] sm:$0xff]
        %v330 = vld [vmem:[%s300 + $0x88] sm:$0xff]
        %v331 = vld [vmem:[%s300 + $0x90] sm:$0xff]
        %v332 = vld [vmem:[%s300 + $0x98] sm:$0xff]
        %v333 = vld [vmem:[%s300 + $0xa0] sm:$0xff]
        %v334 = vld [vmem:[%s300 + $0xa8] sm:$0xff]
        %v335 = vld [vmem:[%s300 + $0xb0] sm:$0xff]
        %v336 = vld [vmem:[%s300 + $0xb8] sm:$0xff]
        %v337 = vld [vmem:[%s300 + $0xc0] sm:$0xff]
        %v338 = vld [vmem:[%s300 + $0xc8] sm:$0xff]
        %v339 = vld [vmem:[%s300 + $0xd0] sm:$0xff]
        %v340 = vld [vmem:[%s300 + $0xd8] sm:$0xff]
        %v341 = vpack.c.bf16 %v315, %v313
        %v342 = vpack.c.bf16 %v316, %v314
        %v343 = vpack.c.bf16 %v319, %v317
        %v344 = vpack.c.bf16 %v320, %v318
        %v345 = vpack.c.bf16 %v323, %v321
        %v346 = vpack.c.bf16 %v324, %v322
        %v347 = vpack.c.bf16 %v327, %v325
        %v348 = vpack.c.bf16 %v328, %v326
        %v349 = vpack.c.bf16 %v331, %v329
        %v350 = vpack.c.bf16 %v332, %v330
        %v351 = vpack.c.bf16 %v335, %v333
        %v352 = vpack.c.bf16 %v336, %v334
        %v353 = vpack.c.bf16 %v339, %v337
        %v354 = vpack.c.bf16 %v340, %v338
        %v355 = vld [vmem:[%s1] sm:$0xf]
        %v356 = vld [vmem:[%s1 + $0x4] sm:$0xf]
        %v357 = vld [vmem:[%s1 + $0x8] sm:$0xf]
        %v358 = vld [vmem:[%s1 + $0xc] sm:$0xf]
        %v359 = vld [vmem:[%s1 + $0x10] sm:$0xf]
        %v360 = vld [vmem:[%s1 + $0x14] sm:$0xf]
        %v361 = vld [vmem:[%s1 + $0x18] sm:$0xf]
        %v362 = vld [vmem:[%s1 + $0x1c] sm:$0xf]
        %v363 = vld [vmem:[%s1 + $0x20] sm:$0xf]
        %v364 = vld [vmem:[%s1 + $0x24] sm:$0xf]
        %v365 = vld [vmem:[%s1 + $0x28] sm:$0xf]
        %v366 = vld [vmem:[%s1 + $0x2c] sm:$0xf]
        %v367 = vld [vmem:[%s1 + $0x30] sm:$0xf]
        %v368 = vld [vmem:[%s1 + $0x34] sm:$0xf]
        %v369 = vld [vmem:[%s1 + $0x38] sm:$0xf]
        %v370 = vld [vmem:[%s1 + $0x3c] sm:$0xf]
        %v371 = vld [vmem:[%s1 + $0x40] sm:$0xf]
        %v372 = vld [vmem:[%s1 + $0x44] sm:$0xf]
        %v373 = vld [vmem:[%s1 + $0x48] sm:$0xf]
        %v374 = vld [vmem:[%s1 + $0x4c] sm:$0xf]
        %v375 = vld [vmem:[%s2] sm:$0x1]
        %v377 = vperm.slane %v375, 0
        %v399 = vunpack.c.l.b16 %v355
        %v400 = vunpack.c.l.b16 %v356
        %v401 = vunpack.c.l.b16 %v357
        %v402 = vunpack.c.l.b16 %v358
        %v403 = vunpack.c.l.b16 %v359
        %v404 = vunpack.c.l.b16 %v360
        %v405 = vunpack.c.l.b16 %v361
        %v406 = vunpack.c.l.b16 %v362
        %v407 = vunpack.c.l.b16 %v363
        %v408 = vunpack.c.l.b16 %v364
        %v409 = vunpack.c.l.b16 %v365
        %v410 = vunpack.c.l.b16 %v366
        %v411 = vunpack.c.l.b16 %v367
        %v412 = vunpack.c.l.b16 %v368
        %v413 = vunpack.c.l.b16 %v369
        %v414 = vunpack.c.l.b16 %v370
        %v415 = vunpack.c.l.b16 %v371
        %v416 = vunpack.c.l.b16 %v372
        %v417 = vunpack.c.l.b16 %v373
        %v418 = vunpack.c.l.b16 %v374
        %v419 = vpack.c.b16 %v400, %v399
        %v420 = vpack.c.b16 %v402, %v401
        %v421 = vpack.c.b16 %v404, %v403
        %v422 = vpack.c.b16 %v406, %v405
        %v423 = vpack.c.b16 %v408, %v407
        %v424 = vpack.c.b16 %v410, %v409
        %v425 = vpack.c.b16 %v412, %v411
        %v426 = vpack.c.b16 %v414, %v413
        %v427 = vpack.c.b16 %v416, %v415
        %v428 = vpack.c.b16 %v418, %v417
        %vm439 = vcmask 261120
        %v441 = vsel %vm439, %v342, 0
        %v444 = vsel %vm439, %v344, 0
        %v447 = vsel %vm439, %v346, 0
        %v450 = vsel %vm439, %v348, 0
        %v453 = vsel %vm439, %v350, 0
        %v456 = vsel %vm439, %v352, 0
        %v459 = vsel %vm439, %v354, 0
        %461 = vmatpush.bf16.msra.mxu0 %v426
        %462 = vmatpush.bf16.msra.mxu0 %v425
        %463 = vmatpush.bf16.msra.mxu0 %v424
        %464 = vmatpush.bf16.msra.mxu0 %v423
        %465 = vmatpush.bf16.msra.mxu0 %v422
        %466 = vmatpush.bf16.msra.mxu0 %v421
        %467 = vmatpush.bf16.msra.mxu0 %v420
        %468 = vmatpush.bf16.msra.mxu0 %v419
        %469 = vmatmul.bf16.gmra.mxu0 %v341
        %v470 = vpop.f32.mrf.mxu0
        %v471 = vadd.f32 %v377, %v470
        %v472 = vpop.f32.mrf.mxu0
        %v473 = vadd.f32 %v377, %v472
        %474 = vmatmul.bf16.gmra.mxu0 %v343
        %v475 = vpop.f32.mrf.mxu0
        %v476 = vadd.f32 %v377, %v475
        %v477 = vpop.f32.mrf.mxu0
        %v478 = vadd.f32 %v377, %v477
        %479 = vmatmul.bf16.gmra.mxu0 %v345
        %v480 = vpop.f32.mrf.mxu0
        %v481 = vadd.f32 %v377, %v480
        %v482 = vpop.f32.mrf.mxu0
        %v483 = vadd.f32 %v377, %v482
        %484 = vmatmul.bf16.gmra.mxu0 %v347
        %v485 = vpop.f32.mrf.mxu0
        %v486 = vadd.f32 %v377, %v485
        %v487 = vpop.f32.mrf.mxu0
        %v488 = vadd.f32 %v377, %v487
        %489 = vmatmul.bf16.gmra.mxu0 %v349
        %v490 = vpop.f32.mrf.mxu0
        %v491 = vadd.f32 %v377, %v490
        %v492 = vpop.f32.mrf.mxu0
        %v493 = vadd.f32 %v377, %v492
        %494 = vmatmul.bf16.gmra.mxu0 %v351
        %v495 = vpop.f32.mrf.mxu0
        %v496 = vadd.f32 %v377, %v495
        %v497 = vpop.f32.mrf.mxu0
        %v498 = vadd.f32 %v377, %v497
        %499 = vmatmul.bf16.gmra.mxu0 %v353
        %v500 = vpop.f32.mrf.mxu0
        %v501 = vadd.f32 %v377, %v500
        %v502 = vpop.f32.mrf.mxu0
        %v503 = vadd.f32 %v377, %v502
        %504 = vdwg.mxu0
        %505 = vmatpush.bf16.msra.mxu0 0
        %506 = vmatpush.bf16.msra.mxu0 0
        %507 = vmatpush.bf16.msra.mxu0 0
        %508 = vmatpush.bf16.msra.mxu0 0
        %509 = vmatpush.bf16.msra.mxu0 0
        %510 = vmatpush.bf16.msra.mxu0 0
        %511 = vmatpush.bf16.msra.mxu0 %v428
        %512 = vmatpush.bf16.msra.mxu0 %v427
        %513 = vmatmul.bf16.gmra.mxu0 %v441
        %v514 = vpop.f32.mrf.mxu0
        %v515 = vadd.f32 %v471, %v514
        %v516 = vpop.f32.mrf.mxu0
        %v517 = vadd.f32 %v473, %v516
        %518 = vmatmul.bf16.gmra.mxu0 %v444
        %v519 = vpop.f32.mrf.mxu0
        %v520 = vadd.f32 %v476, %v519
        %v521 = vpop.f32.mrf.mxu0
        %v522 = vadd.f32 %v478, %v521
        %523 = vmatmul.bf16.gmra.mxu0 %v447
        %v524 = vpop.f32.mrf.mxu0
        %v525 = vadd.f32 %v481, %v524
        %v526 = vpop.f32.mrf.mxu0
        %v527 = vadd.f32 %v483, %v526
        %528 = vmatmul.bf16.gmra.mxu0 %v450
        %v529 = vpop.f32.mrf.mxu0
        %v530 = vadd.f32 %v486, %v529
        %v531 = vpop.f32.mrf.mxu0
        %v532 = vadd.f32 %v488, %v531
        %533 = vmatmul.bf16.gmra.mxu0 %v453
        %v534 = vpop.f32.mrf.mxu0
        %v535 = vadd.f32 %v491, %v534
        %v536 = vpop.f32.mrf.mxu0
        %v537 = vadd.f32 %v493, %v536
        %538 = vmatmul.bf16.gmra.mxu0 %v456
        %v539 = vpop.f32.mrf.mxu0
        %v540 = vadd.f32 %v496, %v539
        %v541 = vpop.f32.mrf.mxu0
        %v542 = vadd.f32 %v498, %v541
        %543 = vmatmul.bf16.gmra.mxu0 %v459
        %v544 = vpop.f32.mrf.mxu0
        %v545 = vadd.f32 %v501, %v544
        %v546 = vpop.f32.mrf.mxu0
        %v547 = vadd.f32 %v503, %v546
        %548 = vdwg.mxu0
        %v549 = vmax.f32 %v515, 0.0
        %v550 = vmax.f32 %v517, 0.0
        %v551 = vmax.f32 %v520, 0.0
        %v552 = vmax.f32 %v522, 0.0
        %v553 = vmax.f32 %v525, 0.0
        %v554 = vmax.f32 %v527, 0.0
        %v555 = vmax.f32 %v530, 0.0
        %v556 = vmax.f32 %v532, 0.0
        %v557 = vmax.f32 %v535, 0.0
        %v558 = vmax.f32 %v537, 0.0
        %v559 = vmax.f32 %v540, 0.0
        %v560 = vmax.f32 %v542, 0.0
        %v561 = vmax.f32 %v545, 0.0
        %v562 = vmax.f32 %v547, 0.0
        %v563 = vpack.c.bf16 %v550, %v549
        %v564 = vpack.c.bf16 %v552, %v551
        %v565 = vpack.c.bf16 %v554, %v553
        %v566 = vpack.c.bf16 %v556, %v555
        %v567 = vpack.c.bf16 %v558, %v557
        %v568 = vpack.c.bf16 %v560, %v559
        %v569 = vpack.c.bf16 %v562, %v561
        %v570 = vld [vmem:[%s3] sm:$0xf]
        %v571 = vld [vmem:[%s3 + $0x4] sm:$0xf]
        %v572 = vld [vmem:[%s3 + $0x8] sm:$0xf]
        %v573 = vld [vmem:[%s3 + $0xc] sm:$0xf]
        %v574 = vld [vmem:[%s3 + $0x10] sm:$0xf]
        %v575 = vld [vmem:[%s3 + $0x14] sm:$0xf]
        %v576 = vld [vmem:[%s3 + $0x18] sm:$0xf]
        %v577 = vld [vmem:[%s3 + $0x1c] sm:$0xf]
        %v578 = vld [vmem:[%s3 + $0x20] sm:$0xf]
        %v579 = vld [vmem:[%s3 + $0x24] sm:$0xf]
        %v580 = vld [vmem:[%s3 + $0x28] sm:$0xf]
        %v581 = vld [vmem:[%s3 + $0x2c] sm:$0xf]
        %v582 = vld [vmem:[%s3 + $0x30] sm:$0xf]
        %v583 = vld [vmem:[%s3 + $0x34] sm:$0xf]
        %v584 = vld [vmem:[%s3 + $0x38] sm:$0xf]
        %v585 = vld [vmem:[%s3 + $0x3c] sm:$0xf]
        %v586 = vld [vmem:[%s4] sm:$0x1]
        %v588 = vperm.slane %v586, 0
        %v606 = vunpack.c.l.b16 %v570
        %v607 = vunpack.c.l.b16 %v571
        %v608 = vunpack.c.l.b16 %v572
        %v609 = vunpack.c.l.b16 %v573
        %v610 = vunpack.c.l.b16 %v574
        %v611 = vunpack.c.l.b16 %v575
        %v612 = vunpack.c.l.b16 %v576
        %v613 = vunpack.c.l.b16 %v577
        %v614 = vunpack.c.l.b16 %v578
        %v615 = vunpack.c.l.b16 %v579
        %v616 = vunpack.c.l.b16 %v580
        %v617 = vunpack.c.l.b16 %v581
        %v618 = vunpack.c.l.b16 %v582
        %v619 = vunpack.c.l.b16 %v583
        %v620 = vunpack.c.l.b16 %v584
        %v621 = vunpack.c.l.b16 %v585
        %v622 = vpack.c.b16 %v607, %v606
        %v623 = vpack.c.b16 %v609, %v608
        %v624 = vpack.c.b16 %v611, %v610
        %v625 = vpack.c.b16 %v613, %v612
        %v626 = vpack.c.b16 %v615, %v614
        %v627 = vpack.c.b16 %v617, %v616
        %v628 = vpack.c.b16 %v619, %v618
        %v629 = vpack.c.b16 %v621, %v620
        %638 = vmatpush.bf16.msra.mxu0 %v629
        %639 = vmatpush.bf16.msra.mxu0 %v628
        %640 = vmatpush.bf16.msra.mxu0 %v627
        %641 = vmatpush.bf16.msra.mxu0 %v626
        %642 = vmatpush.bf16.msra.mxu0 %v625
        %643 = vmatpush.bf16.msra.mxu0 %v624
        %644 = vmatpush.bf16.msra.mxu0 %v623
        %645 = vmatpush.bf16.msra.mxu0 %v622
        %646 = vmatmul.bf16.gmra.mxu0 %v563
        %v647 = vpop.f32.mrf.mxu0
        %v648 = vadd.f32 %v588, %v647
        %v649 = vpop.f32.mrf.mxu0
        %v650 = vadd.f32 %v588, %v649
        %651 = vmatmul.bf16.gmra.mxu0 %v564
        %v652 = vpop.f32.mrf.mxu0
        %v653 = vadd.f32 %v588, %v652
        %v654 = vpop.f32.mrf.mxu0
        %v655 = vadd.f32 %v588, %v654
        %656 = vmatmul.bf16.gmra.mxu0 %v565
        %v657 = vpop.f32.mrf.mxu0
        %v658 = vadd.f32 %v588, %v657
        %v659 = vpop.f32.mrf.mxu0
        %v660 = vadd.f32 %v588, %v659
        %661 = vmatmul.bf16.gmra.mxu0 %v566
        %v662 = vpop.f32.mrf.mxu0
        %v663 = vadd.f32 %v588, %v662
        %v664 = vpop.f32.mrf.mxu0
        %v665 = vadd.f32 %v588, %v664
        %666 = vmatmul.bf16.gmra.mxu0 %v567
        %v667 = vpop.f32.mrf.mxu0
        %v668 = vadd.f32 %v588, %v667
        %v669 = vpop.f32.mrf.mxu0
        %v670 = vadd.f32 %v588, %v669
        %671 = vmatmul.bf16.gmra.mxu0 %v568
        %v672 = vpop.f32.mrf.mxu0
        %v673 = vadd.f32 %v588, %v672
        %v674 = vpop.f32.mrf.mxu0
        %v675 = vadd.f32 %v588, %v674
        %676 = vmatmul.bf16.gmra.mxu0 %v569
        %v677 = vpop.f32.mrf.mxu0
        %v678 = vadd.f32 %v588, %v677
        %v679 = vpop.f32.mrf.mxu0
        %v680 = vadd.f32 %v588, %v679
        %681 = vdwg.mxu0
        %v682 = vmax.f32 %v648, 0.0
        %v683 = vmax.f32 %v650, 0.0
        %v684 = vmax.f32 %v653, 0.0
        %v685 = vmax.f32 %v655, 0.0
        %v686 = vmax.f32 %v658, 0.0
        %v687 = vmax.f32 %v660, 0.0
        %v688 = vmax.f32 %v663, 0.0
        %v689 = vmax.f32 %v665, 0.0
        %v690 = vmax.f32 %v668, 0.0
        %v691 = vmax.f32 %v670, 0.0
        %v692 = vmax.f32 %v673, 0.0
        %v693 = vmax.f32 %v675, 0.0
        %v694 = vmax.f32 %v678, 0.0
        %v695 = vmax.f32 %v680, 0.0
        %v696 = vpack.c.bf16 %v683, %v682
        %v697 = vpack.c.bf16 %v685, %v684
        %v698 = vpack.c.bf16 %v687, %v686
        %v699 = vpack.c.bf16 %v689, %v688
        %v700 = vpack.c.bf16 %v691, %v690
        %v701 = vpack.c.bf16 %v693, %v692
        %v702 = vpack.c.bf16 %v695, %v694
        %v703 = vld [vmem:[%s5] sm:$0xf]
        %v704 = vld [vmem:[%s5 + $0x4] sm:$0xf]
        %v705 = vld [vmem:[%s5 + $0x8] sm:$0xf]
        %v706 = vld [vmem:[%s5 + $0xc] sm:$0xf]
        %v707 = vld [vmem:[%s5 + $0x10] sm:$0xf]
        %v708 = vld [vmem:[%s5 + $0x14] sm:$0xf]
        %v709 = vld [vmem:[%s5 + $0x18] sm:$0xf]
        %v710 = vld [vmem:[%s5 + $0x1c] sm:$0xf]
        %v711 = vld [vmem:[%s5 + $0x20] sm:$0xf]
        %v712 = vld [vmem:[%s5 + $0x24] sm:$0xf]
        %v713 = vld [vmem:[%s5 + $0x28] sm:$0xf]
        %v714 = vld [vmem:[%s5 + $0x2c] sm:$0xf]
        %v715 = vld [vmem:[%s5 + $0x30] sm:$0xf]
        %v716 = vld [vmem:[%s5 + $0x34] sm:$0xf]
        %v717 = vld [vmem:[%s5 + $0x38] sm:$0xf]
        %v718 = vld [vmem:[%s5 + $0x3c] sm:$0xf]
        %v719 = vld [vmem:[%s6] sm:$0x1]
        %v721 = vperm.slane %v719, 0
        %v739 = vunpack.c.l.b16 %v703
        %v740 = vunpack.c.l.b16 %v704
        %v741 = vunpack.c.l.b16 %v705
        %v742 = vunpack.c.l.b16 %v706
        %v743 = vunpack.c.l.b16 %v707
        %v744 = vunpack.c.l.b16 %v708
        %v745 = vunpack.c.l.b16 %v709
        %v746 = vunpack.c.l.b16 %v710
        %v747 = vunpack.c.l.b16 %v711
        %v748 = vunpack.c.l.b16 %v712
        %v749 = vunpack.c.l.b16 %v713
        %v750 = vunpack.c.l.b16 %v714
        %v751 = vunpack.c.l.b16 %v715
        %v752 = vunpack.c.l.b16 %v716
        %v753 = vunpack.c.l.b16 %v717
        %v754 = vunpack.c.l.b16 %v718
        %v755 = vpack.c.b16 %v740, %v739
        %v756 = vpack.c.b16 %v742, %v741
        %v757 = vpack.c.b16 %v744, %v743
        %v758 = vpack.c.b16 %v746, %v745
        %v759 = vpack.c.b16 %v748, %v747
        %v760 = vpack.c.b16 %v750, %v749
        %v761 = vpack.c.b16 %v752, %v751
        %v762 = vpack.c.b16 %v754, %v753
        %771 = vmatpush.bf16.msra.mxu0 %v762
        %772 = vmatpush.bf16.msra.mxu0 %v761
        %773 = vmatpush.bf16.msra.mxu0 %v760
        %774 = vmatpush.bf16.msra.mxu0 %v759
        %775 = vmatpush.bf16.msra.mxu0 %v758
        %776 = vmatpush.bf16.msra.mxu0 %v757
        %777 = vmatpush.bf16.msra.mxu0 %v756
        %778 = vmatpush.bf16.msra.mxu0 %v755
        %779 = vmatmul.bf16.gmra.mxu0 %v696
        %v780 = vpop.f32.mrf.mxu0
        %v781 = vadd.f32 %v721, %v780
        %v782 = vpop.f32.mrf.mxu0
        %v783 = vadd.f32 %v721, %v782
        %784 = vmatmul.bf16.gmra.mxu0 %v697
        %v785 = vpop.f32.mrf.mxu0
        %v786 = vadd.f32 %v721, %v785
        %v787 = vpop.f32.mrf.mxu0
        %v788 = vadd.f32 %v721, %v787
        %789 = vmatmul.bf16.gmra.mxu0 %v698
        %v790 = vpop.f32.mrf.mxu0
        %v791 = vadd.f32 %v721, %v790
        %v792 = vpop.f32.mrf.mxu0
        %v793 = vadd.f32 %v721, %v792
        %794 = vmatmul.bf16.gmra.mxu0 %v699
        %v795 = vpop.f32.mrf.mxu0
        %v796 = vadd.f32 %v721, %v795
        %v797 = vpop.f32.mrf.mxu0
        %v798 = vadd.f32 %v721, %v797
        %799 = vmatmul.bf16.gmra.mxu0 %v700
        %v800 = vpop.f32.mrf.mxu0
        %v801 = vadd.f32 %v721, %v800
        %v802 = vpop.f32.mrf.mxu0
        %v803 = vadd.f32 %v721, %v802
        %804 = vmatmul.bf16.gmra.mxu0 %v701
        %v805 = vpop.f32.mrf.mxu0
        %v806 = vadd.f32 %v721, %v805
        %v807 = vpop.f32.mrf.mxu0
        %v808 = vadd.f32 %v721, %v807
        %809 = vmatmul.bf16.gmra.mxu0 %v702
        %v810 = vpop.f32.mrf.mxu0
        %v811 = vadd.f32 %v721, %v810
        %v812 = vpop.f32.mrf.mxu0
        %v813 = vadd.f32 %v721, %v812
        %814 = vdwg.mxu0
        %815 = vmax.xlane.f32.xlu0 %v781
        %v816 = vpop.xlane.xlu0 %815
        %817 = vmax.xlane.f32.xlu0 %v783
        %v818 = vpop.xlane.xlu0 %817
        %819 = vmax.xlane.f32.xlu0 %v786
        %v820 = vpop.xlane.xlu0 %819
        %821 = vmax.xlane.f32.xlu0 %v788
        %v822 = vpop.xlane.xlu0 %821
        %823 = vmax.xlane.f32.xlu0 %v791
        %v824 = vpop.xlane.xlu0 %823
        %825 = vmax.xlane.f32.xlu0 %v793
        %v826 = vpop.xlane.xlu0 %825
        %827 = vmax.xlane.f32.xlu0 %v796
        %v828 = vpop.xlane.xlu0 %827
        %829 = vmax.xlane.f32.xlu0 %v798
        %v830 = vpop.xlane.xlu0 %829
        %831 = vmax.xlane.f32.xlu0 %v801
        %v832 = vpop.xlane.xlu0 %831
        %833 = vmax.xlane.f32.xlu0 %v803
        %v834 = vpop.xlane.xlu0 %833
        %835 = vmax.xlane.f32.xlu0 %v806
        %v836 = vpop.xlane.xlu0 %835
        %837 = vmax.xlane.f32.xlu0 %v808
        %v838 = vpop.xlane.xlu0 %837
        %839 = vmax.xlane.f32.xlu0 %v811
        %v840 = vpop.xlane.xlu0 %839
        %841 = vmax.xlane.f32.xlu0 %v813
        %v842 = vpop.xlane.xlu0 %841
        %v843 = vsub.f32 %v781, %v816
        %v844 = vsub.f32 %v783, %v818
        %v845 = vsub.f32 %v786, %v820
        %v846 = vsub.f32 %v788, %v822
        %v847 = vsub.f32 %v791, %v824
        %v848 = vsub.f32 %v793, %v826
        %v849 = vsub.f32 %v796, %v828
        %v850 = vsub.f32 %v798, %v830
        %v851 = vsub.f32 %v801, %v832
        %v852 = vsub.f32 %v803, %v834
        %v853 = vsub.f32 %v806, %v836
        %v854 = vsub.f32 %v808, %v838
        %v855 = vsub.f32 %v811, %v840
        %v856 = vsub.f32 %v813, %v842
        %v857 = vmul.f32 %v843, 1.442695
        %v858 = vpow.pop %v857
        %v859 = vmul.f32 %v844, 1.442695
        %v860 = vpow.pop %v859
        %v861 = vmul.f32 %v845, 1.442695
        %v862 = vpow.pop %v861
        %v863 = vmul.f32 %v846, 1.442695
        %v864 = vpow.pop %v863
        %v865 = vmul.f32 %v847, 1.442695
        %v866 = vpow.pop %v865
        %v867 = vmul.f32 %v848, 1.442695
        %v868 = vpow.pop %v867
        %v869 = vmul.f32 %v849, 1.442695
        %v870 = vpow.pop %v869
        %v871 = vmul.f32 %v850, 1.442695
        %v872 = vpow.pop %v871
        %v873 = vmul.f32 %v851, 1.442695
        %v874 = vpow.pop %v873
        %v875 = vmul.f32 %v852, 1.442695
        %v876 = vpow.pop %v875
        %v877 = vmul.f32 %v853, 1.442695
        %v878 = vpow.pop %v877
        %v879 = vmul.f32 %v854, 1.442695
        %v880 = vpow.pop %v879
        %v881 = vmul.f32 %v855, 1.442695
        %v882 = vpow.pop %v881
        %v883 = vmul.f32 %v856, 1.442695
        %v884 = vpow.pop %v883
        %885 = vadd.xlane.f32.xlu0 %v858
        %v886 = vpop.xlane.xlu0 %885
        %887 = vadd.xlane.f32.xlu0 %v860
        %v888 = vpop.xlane.xlu0 %887
        %889 = vadd.xlane.f32.xlu0 %v862
        %v890 = vpop.xlane.xlu0 %889
        %891 = vadd.xlane.f32.xlu0 %v864
        %v892 = vpop.xlane.xlu0 %891
        %893 = vadd.xlane.f32.xlu0 %v866
        %v894 = vpop.xlane.xlu0 %893
        %895 = vadd.xlane.f32.xlu0 %v868
        %v896 = vpop.xlane.xlu0 %895
        %897 = vadd.xlane.f32.xlu0 %v870
        %v898 = vpop.xlane.xlu0 %897
        %899 = vadd.xlane.f32.xlu0 %v872
        %v900 = vpop.xlane.xlu0 %899
        %901 = vadd.xlane.f32.xlu0 %v874
        %v902 = vpop.xlane.xlu0 %901
        %903 = vadd.xlane.f32.xlu0 %v876
        %v904 = vpop.xlane.xlu0 %903
        %905 = vadd.xlane.f32.xlu0 %v878
        %v906 = vpop.xlane.xlu0 %905
        %907 = vadd.xlane.f32.xlu0 %v880
        %v908 = vpop.xlane.xlu0 %907
        %909 = vadd.xlane.f32.xlu0 %v882
        %v910 = vpop.xlane.xlu0 %909
        %911 = vadd.xlane.f32.xlu0 %v884
        %v912 = vpop.xlane.xlu0 %911
        %v913 = vrcp.pop %v886
        %v914 = vrcp.pop %v888
        %v915 = vrcp.pop %v890
        %v916 = vrcp.pop %v892
        %v917 = vrcp.pop %v894
        %v918 = vrcp.pop %v896
        %v919 = vrcp.pop %v898
        %v920 = vrcp.pop %v900
        %v921 = vrcp.pop %v902
        %v922 = vrcp.pop %v904
        %v923 = vrcp.pop %v906
        %v924 = vrcp.pop %v908
        %v925 = vrcp.pop %v910
        %v926 = vrcp.pop %v912
        %v927 = vmul.f32 %v858, %v913
        %v928 = vmul.f32 %v860, %v914
        %v929 = vmul.f32 %v862, %v915
        %v930 = vmul.f32 %v864, %v916
        %v931 = vmul.f32 %v866, %v917
        %v932 = vmul.f32 %v868, %v918
        %v933 = vmul.f32 %v870, %v919
        %v934 = vmul.f32 %v872, %v920
        %v935 = vmul.f32 %v874, %v921
        %v936 = vmul.f32 %v876, %v922
        %v937 = vmul.f32 %v878, %v923
        %v938 = vmul.f32 %v880, %v924
        %v939 = vmul.f32 %v882, %v925
        %v940 = vmul.f32 %v884, %v926
        %941 = vst [vmem:[%s289] sm:$0xff] %v927
        %942 = vst [vmem:[%s289 + $0x8] sm:$0xff] %v928
        %943 = vst [vmem:[%s289 + $0x10] sm:$0xff] %v929
        %944 = vst [vmem:[%s289 + $0x18] sm:$0xff] %v930
        %945 = vst [vmem:[%s289 + $0x20] sm:$0xff] %v931
        %946 = vst [vmem:[%s289 + $0x28] sm:$0xff] %v932
        %947 = vst [vmem:[%s289 + $0x30] sm:$0xff] %v933
        %948 = vst [vmem:[%s289 + $0x38] sm:$0xff] %v934
        %949 = vst [vmem:[%s289 + $0x40] sm:$0xff] %v935
        %950 = vst [vmem:[%s289 + $0x48] sm:$0xff] %v936
        %951 = vst [vmem:[%s289 + $0x50] sm:$0xff] %v937
        %952 = vst [vmem:[%s289 + $0x58] sm:$0xff] %v938
        %953 = vst [vmem:[%s289 + $0x60] sm:$0xff] %v939
        %954 = vst [vmem:[%s289 + $0x68] sm:$0xff] %v940
        %s955 = sand.u32 %s181, 1
        %s956 = scalar_lea.sflag [#allocation3], %s955
        %s957 = sand.u32 %s181, 1
        %s958 = smul.addr %s957, 112
        %s959 = scalar_lea.vmem [#allocation2], %s958
        // Predicated region
        $region49: #{tpu_custom_call.1} parent=47 // pred_check
          %p960 = pneg %p191
        $region50: #{tpu_custom_call.1} parent=47 // pred_check_branch
          %962 = sbr.rel (%p960) target = $region52
        $region51: #{tpu_custom_call.1} parent=47 // pred_region
          %s963 = smul.u32 14, %s21
          %s964 = ssub.s32 25, %s963
          %p965 = scmp.lt.s32.totalorder %s964, 14
          %s966 = scalar_select %p965, %s964, 14
          %s967 = smul.u32 8, %s966
          %s968 = ssub.s32 112, %s967
          %s969 = sshll.u32 %s968, 4
          %970 = vsyncadd %s956, %s969
          %p971 = scmp.ne.s32.totalorder 0, %s967
          %s972 = smul.addr %s963, 8
          %s973 = scalar_lea.hbm %s7, %s972
          %s974 = smul.u32 8, %s966
          %s975 = sshll.u32 %s959, 4
          %s976 = int_to_ptr.vmem [resolvable:$true] %s975
          %s977 = sshll.u32 %s973, 4
          %s978 = int_to_ptr.hbm [resolvable:$true] %s977
          %s979 = sshll.u32 %s974, 4
          %983 = dma.vmem_to_hbm [thread:$0]  (%p971), %s976, %s979, %s978, %s956, 128, 128, 8
        $region52: #{tpu_custom_call.1} parent=47 // pred_fallthru
          _
      $region48: #{tpu_custom_call.1} parent=5 // pred_fallthru
        _
      %p984 = scmp.le.s32.totalorder 2, %s16
      // Predicated region
      $region53: #{tpu_custom_call.1} parent=5 // pred_check
        %p985 = pneg %p984
      $region54: #{tpu_custom_call.1} parent=5 // pred_check_branch
        %987 = sbr.rel (%p985) target = $region56
      $region55: #{tpu_custom_call.1} parent=5 // pred_region
        %s988 = ssub.s32 %s16, 2
        // Predicated region
        $region57: #{tpu_custom_call.1} parent=55 // pred_check
          %p989 = pneg %p197
        $region58: #{tpu_custom_call.1} parent=55 // pred_check_branch
          %991 = sbr.rel (%p989) target = $region60
        $region59: #{tpu_custom_call.1} parent=55 // pred_region
          %s992 = sand.u32 %s182, 1
          %s993 = scalar_lea.sflag [#allocation3], %s992
          %s994 = sand.u32 %s182, 1
          %s995 = smul.addr %s994, 112
          %s996 = scalar_lea.vmem [#allocation2], %s995
          %998 = dma.done %s993, 1792
        $region60: #{tpu_custom_call.1} parent=55 // pred_fallthru
          _
      $region56: #{tpu_custom_call.1} parent=5 // pred_fallthru
        _
    $region6: #{tpu_custom_call.1} parent=1 // loop_footer
      %s20 = sadd.s32 1, %s16
    $region7: #{tpu_custom_call.1} parent=1 // loop_footer_branch
      %15 = sbr.rel target = $region3
    $region8: #{tpu_custom_call.1} parent=1 // loop_exit
      _
    %999 = vsyncpa [#allocation3], 1
    %s1000 = scalar_lea.sflag [#allocation3], 1
    %1001 = vsyncpa %s1000, 1

</llo_original>
